<compile_context>
chip_gen: v6e
topology: v6e:2x2x1
jax: 0.10.0
libtpu: 0.0.40
codegen_flags: <defaults>
</compile_context>

<pallas_src>
import functools
import math

import jax
import jax.numpy as jnp
from jax.experimental import pallas as pl
from jax.experimental.pallas import tpu as pltpu


# ---------------------------------------------------------------------------
# Kernel
# ---------------------------------------------------------------------------
def basic_block_kernel(x_ref, bw1_ref, b1_ref, bw2_ref, b2_ref, o_ref, *, img_rows):
    """Fused BasicBlock: conv1+bn1+relu -> conv2+bn2 -> +identity -> relu.

    x_ref  : (M, WC)      bf16 activation slab, M = Nb*H rows, lane axis = W*Cp
    bw*_ref: (3*WC, WC)   bf16 banded conv weights (BN scale folded, kh stacked on K)
    b*_ref : (1, WC)      f32 folded BN bias, tiled across W
    o_ref  : (M, WC)      f32 output slab
    """
    f32 = jnp.float32
    m = x_ref.shape[0]

    x = x_ref[...].astype(f32)                       # (M, WC): conv1 input + residual

    # Row index within each image; used to zero the wrapped / out-of-image halo
    # rows of the rolled copies (encodes the conv's zero padding along H and
    # keeps the images folded into M from bleeding into each other).
    row = jax.lax.broadcasted_iota(jnp.int32, (m, 1), 0) % img_rows
    not_top = row != 0
    not_bot = row != (img_rows - 1)

    def conv3x3_bn(act, bw_ref, b_ref):
        # act: (M, WC) f32.  kh taps via XLU roll (+1 / -1 rows) + VPU mask.
        a_up = jnp.where(not_top, pltpu.roll(act, shift=1, axis=0), 0.0)
        a_dn = jnp.where(not_bot, pltpu.roll(act, shift=m - 1, axis=0), 0.0)
        # One fat MXU matmul per conv: K = 3*WC (kh taps stacked), N = WC.
        a = jnp.concatenate([a_up, act, a_dn], axis=-1).astype(jnp.bfloat16)
        acc = jnp.dot(a, bw_ref[...], preferred_element_type=f32)
        return acc + b_ref[...]                       # (M, WC) f32

    mid = jnp.maximum(conv3x3_bn(x, bw1_ref, b1_ref), 0.0)    # conv1 + bn1 + relu
    out = conv3x3_bn(mid, bw2_ref, b2_ref) + x                 # conv2 + bn2 + identity
    o_ref[...] = jnp.maximum(out, 0.0).astype(o_ref.dtype)     # final relu


# ---------------------------------------------------------------------------
# Host-side parameter preprocessing (plain XLA, tiny tensors)
# ---------------------------------------------------------------------------
def _fold_bn(gamma, beta, mean, var, eps=1e-5):
    scale = gamma / jnp.sqrt(var + eps)
    bias = beta - mean * scale
    return scale.astype(jnp.float32), bias.astype(jnp.float32)


def _pad_channels(c, width, lane=128):
    """Smallest c' >= c such that width * c' is a multiple of `lane`."""
    step = lane // math.gcd(width, lane)
    return ((c + step - 1) // step) * step


def _pick_batch_block(n, h, target_rows=256):
    """Largest divisor of n whose row count nb*h stays <= max(target_rows, h)."""
    best = 1
    for nb in range(1, n + 1):
        if n % nb == 0 and nb * h <= max(target_rows, h):
            best = nb
    return best


def _banded_weights(w_hwio, scale, width, c_pad):
    """Fold BN scale into the conv weights, band over W, stack kh taps along K.

    Returns (3*width*c_pad, width*c_pad) bf16 with
      big[kh*W*Cp + r*Cp + ci, w*Cp + co] = w[kh, kw, ci, co] * scale[co]
    where r == w + kw - 1 (padding=1); zero elsewhere (encodes the width
    zero-padding and the channel padding).
    """
    kh, kw, cin, cout = w_hwio.shape
    w_f = (w_hwio * scale[None, None, None, :]).astype(jnp.float32)
    w_f = jnp.pad(w_f, ((0, 0), (0, 0), (0, c_pad - cin), (0, c_pad - cout)))
    r = jnp.arange(width)
    w_idx = jnp.arange(width)
    taps = jnp.arange(kw)
    band = (r[None, :, None] == (w_idx[None, None, :] + taps[:, None, None] - 1))
    band = band.astype(jnp.float32)                        # (kw, W, W)
    big = jnp.einsum("krw,hkio->hriwo", band, w_f)         # (kh, W, Cp, W, Cp)
    return big.reshape(kh * width * c_pad, width * c_pad).astype(jnp.bfloat16)


# ---------------------------------------------------------------------------
# Forward wrapper
# ---------------------------------------------------------------------------
def basic_block_forward(x_nchw, params, eps=1e-5):
    """BasicBlock forward (stride=1, no downsample). x_nchw: (N, C, H, W) f32."""
    # TODO(synk): stride > 1 and the optional downsample branch are not
    # instantiated in this block configuration.
    N, C, H, W = x_nchw.shape
    Cp = _pad_channels(C, W)              # lane dim W*Cp is a multiple of 128
    WC = W * Cp
    Nb = _pick_batch_block(N, H)          # images folded into the matmul M dim
    M = Nb * H

    # NCHW -> lane-dense (N*H, W*Cp) bf16 slab (channels zero-padded).  In an
    # NHWC end-to-end pipeline this transpose disappears.
    x = jnp.transpose(x_nchw, (0, 2, 3, 1))
    x = jnp.pad(x, ((0, 0), (0, 0), (0, 0), (0, Cp - C)))
    x = x.reshape(N * H, WC).astype(jnp.bfloat16)

    s1, b1 = _fold_bn(params["bn1_gamma"], params["bn1_beta"],
                      params["bn1_mean"], params["bn1_var"], eps)
    s2, b2 = _fold_bn(params["bn2_gamma"], params["bn2_beta"],
                      params["bn2_mean"], params["bn2_var"], eps)

    bw1 = _banded_weights(params["w1"], s1, W, Cp)          # (3*WC, WC) bf16
    bw2 = _banded_weights(params["w2"], s2, W, Cp)
    b1t = jnp.tile(jnp.pad(b1, (0, Cp - C)), W).reshape(1, WC)   # f32 bias, W-tiled
    b2t = jnp.tile(jnp.pad(b2, (0, Cp - C)), W).reshape(1, WC)

    kernel = functools.partial(basic_block_kernel, img_rows=H)

    # TODO(synk): at real ResNet widths (W*C >= 3584) the dense (3*WC, WC) band
    # must be tiled block-tridiagonally over a reduction grid axis, the
    # grid-invariant weights single-buffered via pipeline_mode=pl.Buffered(1),
    # and a 1-row-halo row-band grid axis added so v7x's two cores each get
    # >=2 steps; at this toy size the whole problem fits in a single grid step.
    out = pl.pallas_call(
        kernel,
        out_shape=jax.ShapeDtypeStruct((N * H, WC), jnp.float32),
        grid=(N // Nb,),
        in_specs=[
            pl.BlockSpec((M, WC), lambda n: (n, 0)),          # activation slab
            pl.BlockSpec((3 * WC, WC), lambda n: (0, 0)),     # fused conv1 weights
            pl.BlockSpec((1, WC), lambda n: (0, 0)),          # bn1 bias
            pl.BlockSpec((3 * WC, WC), lambda n: (0, 0)),     # fused conv2 weights
            pl.BlockSpec((1, WC), lambda n: (0, 0)),          # bn2 bias
        ],
        out_specs=pl.BlockSpec((M, WC), lambda n: (n, 0)),
        compiler_params=pltpu.CompilerParams(dimension_semantics=("parallel",)),
    )(x, bw1, b1t, bw2, b2t)

    out = out.reshape(N, H, W, Cp)[..., :C]                   # drop channel pad
    return jnp.transpose(out, (0, 3, 1, 2))                   # back to NCHW (f32)


# ---------------------------------------------------------------------------
# Pure-JAX (XLA) reference matching PyTorch eval-mode semantics
# ---------------------------------------------------------------------------
def _reference_forward(x_nchw, params, eps=1e-5):
    def conv3x3(x, w_oihw):
        return jax.lax.conv_general_dilated(
            x, w_oihw, window_strides=(1, 1), padding=((1, 1), (1, 1)),
            dimension_numbers=("NCHW", "OIHW", "NCHW"))

    def bn(x, g, b, m, v):
        g = g.reshape(1, -1, 1, 1); b = b.reshape(1, -1, 1, 1)
        m = m.reshape(1, -1, 1, 1); v = v.reshape(1, -1, 1, 1)
        return (x - m) / jnp.sqrt(v + eps) * g + b

    w1_oihw = jnp.transpose(params["w1"], (3, 2, 0, 1))   # HWIO -> OIHW
    w2_oihw = jnp.transpose(params["w2"], (3, 2, 0, 1))

    out = conv3x3(x_nchw, w1_oihw)
    out = bn(out, params["bn1_gamma"], params["bn1_beta"],
             params["bn1_mean"], params["bn1_var"])
    out = jnp.maximum(out, 0.0)
    out = conv3x3(out, w2_oihw)
    out = bn(out, params["bn2_gamma"], params["bn2_beta"],
             params["bn2_mean"], params["bn2_var"])
    out = out + x_nchw
    return jnp.maximum(out, 0.0)


if __name__ == "__main__":
    # BasicBlock(inplanes=4, planes=4, stride=1, downsample=None)
    N, C, H, W = 2, 4, 16, 16

    key = jax.random.PRNGKey(0)
    keys = jax.random.split(key, 11)

    x = jax.random.normal(keys[0], (N, C, H, W), jnp.float32)

    params = {
        # conv weights stored HWIO (kh, kw, Cin, Cout)
        "w1": 0.1 * jax.random.normal(keys[1], (3, 3, C, C), jnp.float32),
        "w2": 0.1 * jax.random.normal(keys[2], (3, 3, C, C), jnp.float32),
        "bn1_gamma": 1.0 + 0.1 * jax.random.normal(keys[3], (C,), jnp.float32),
        "bn1_beta": 0.1 * jax.random.normal(keys[4], (C,), jnp.float32),
        "bn1_mean": 0.1 * jax.random.normal(keys[5], (C,), jnp.float32),
        "bn1_var": jnp.abs(jax.random.normal(keys[6], (C,), jnp.float32)) + 0.5,
        "bn2_gamma": 1.0 + 0.1 * jax.random.normal(keys[7], (C,), jnp.float32),
        "bn2_beta": 0.1 * jax.random.normal(keys[8], (C,), jnp.float32),
        "bn2_mean": 0.1 * jax.random.normal(keys[9], (C,), jnp.float32),
        "bn2_var": jnp.abs(jax.random.normal(keys[10], (C,), jnp.float32)) + 0.5,
    }

    out = jax.jit(basic_block_forward)(x, params)
    out = jax.block_until_ready(out)

    ref = _reference_forward(x, params)
    assert out.shape == (N, C, H, W), out.shape
    max_err = float(jnp.max(jnp.abs(out - ref)))
    # bf16 activations/weights with f32 accumulation -> looser tolerance than f32.
    assert jnp.allclose(out, ref, atol=5e-2, rtol=5e-2), max_err

    print("KERNEL_OK")
</pallas_src>

<mosaic_0001>
module attributes {stable_mosaic.version = 11 : i64} {
  func.func @basic_block_kernel(%arg0: i32, %arg1: memref<32x128xbf16, #tpu.memory_space<vmem>>, %arg2: memref<384x128xbf16, #tpu.memory_space<vmem>>, %arg3: memref<1x128xf32, #tpu.memory_space<vmem>>, %arg4: memref<384x128xbf16, #tpu.memory_space<vmem>>, %arg5: memref<1x128xf32, #tpu.memory_space<vmem>>, %arg6: memref<32x128xf32, #tpu.memory_space<vmem>>) attributes {dimension_semantics = [#tpu.dimension_semantics<parallel>], iteration_bounds = array<i64: 1>, scalar_prefetch = 0 : i64, scratch_operands = 0 : i64, tpu.core_type = #tpu.core_type<tc>, window_params = [{transform_indices = @transform_0, window_bounds = array<i64: 32, 128>}, {pipeline_mode = #tpu.pipeline_mode<synchronous>, transform_indices = @transform_1, window_bounds = array<i64: 384, 128>}, {pipeline_mode = #tpu.pipeline_mode<synchronous>, transform_indices = @transform_2, window_bounds = array<i64: 1, 128>}, {pipeline_mode = #tpu.pipeline_mode<synchronous>, transform_indices = @transform_3, window_bounds = array<i64: 384, 128>}, {pipeline_mode = #tpu.pipeline_mode<synchronous>, transform_indices = @transform_4, window_bounds = array<i64: 1, 128>}, {transform_indices = @transform_5, window_bounds = array<i64: 32, 128>}]} {
    %c0 = arith.constant 0 : index
    %c0_0 = arith.constant 0 : index
    %0 = vector.load %arg1[%c0, %c0_0] : memref<32x128xbf16, #tpu.memory_space<vmem>>, vector<32x128xbf16>
    %1 = arith.extf %0 : vector<32x128xbf16> to vector<32x128xf32>
    %2 = tpu.iota {dimensions = array<i32: 0>} : vector<32x1xi32>
    %c16_i32 = arith.constant 16 : i32
    %c0_i32 = arith.constant 0 : i32
    %3 = arith.cmpi eq, %c16_i32, %c0_i32 : i32
    %c1_i32 = arith.constant 1 : i32
    %4 = arith.select %3, %c1_i32, %c16_i32 : i32
    %5 = vector.broadcast %4 : i32 to vector<32x1xi32>
    %6 = arith.remsi %2, %5 : vector<32x1xi32>
    %c0_i32_1 = arith.constant 0 : i32
    %7 = vector.broadcast %c0_i32_1 : i32 to vector<32x1xi32>
    %8 = arith.cmpi ne, %6, %7 : vector<32x1xi32>
    %c0_i32_2 = arith.constant 0 : i32
    %9 = vector.broadcast %c0_i32_2 : i32 to vector<32x1xi32>
    %10 = arith.cmpi slt, %6, %9 : vector<32x1xi32>
    %c0_i32_3 = arith.constant 0 : i32
    %11 = arith.cmpi slt, %4, %c0_i32_3 : i32
    %12 = vector.broadcast %11 : i1 to vector<32x1xi1>
    %13 = vector.broadcast %12 : vector<32x1xi1> to vector<32x1xi1>
    %14 = arith.xori %10, %13 : vector<32x1xi1>
    %15 = arith.andi %14, %8 : vector<32x1xi1>
    %16 = vector.broadcast %4 : i32 to vector<32x1xi32>
    %17 = arith.addi %6, %16 : vector<32x1xi32>
    %18 = arith.select %15, %17, %6 : vector<32x1xi1>, vector<32x1xi32>
    %c0_i32_4 = arith.constant 0 : i32
    %19 = vector.broadcast %c0_i32_4 : i32 to vector<32x1xi32>
    %20 = arith.cmpi ne, %18, %19 : vector<32x1xi32>
    %c15_i32 = arith.constant 15 : i32
    %21 = vector.broadcast %c15_i32 : i32 to vector<32x1xi32>
    %22 = arith.cmpi ne, %18, %21 : vector<32x1xi32>
    %c1_i32_5 = arith.constant 1 : i32
    %23 = tpu.dynamic_rotate %1 by %c1_i32_5 dim 0 : vector<32x128xf32>, i32 -> vector<32x128xf32>
    %cst = arith.constant 0.000000e+00 : f32
    %24 = vector.shape_cast %20 : vector<32x1xi1> to vector<32x1xi1>
    %25 = vector.broadcast %24 : vector<32x1xi1> to vector<32x128xi1>
    %26 = vector.broadcast %cst : f32 to vector<32x128xf32>
    %27 = arith.select %25, %23, %26 : vector<32x128xi1>, vector<32x128xf32>
    %c31_i32 = arith.constant 31 : i32
    %28 = tpu.dynamic_rotate %1 by %c31_i32 dim 0 : vector<32x128xf32>, i32 -> vector<32x128xf32>
    %cst_6 = arith.constant 0.000000e+00 : f32
    %29 = vector.shape_cast %22 : vector<32x1xi1> to vector<32x1xi1>
    %30 = vector.broadcast %29 : vector<32x1xi1> to vector<32x128xi1>
    %31 = vector.broadcast %cst_6 : f32 to vector<32x128xf32>
    %32 = arith.select %30, %28, %31 : vector<32x128xi1>, vector<32x128xf32>
    %33 = tpu.concatenate %27, %1, %32 in 1 : vector<32x128xf32>, vector<32x128xf32>, vector<32x128xf32> -> vector<32x384xf32>
    %34 = arith.truncf %33 : vector<32x384xf32> to vector<32x384xbf16>
    %c0_7 = arith.constant 0 : index
    %c0_8 = arith.constant 0 : index
    %35 = vector.load %arg2[%c0_7, %c0_8] : memref<384x128xbf16, #tpu.memory_space<vmem>>, vector<384x128xbf16>
    %cst_9 = arith.constant dense<0.000000e+00> : vector<32x128xf32>
    %36 = tpu.matmul %34, %35, %cst_9 {dimension_numbers = #tpu.dot_dimension_numbers<[1], [0], [0], [1], [0, 0, 1, 1], [], []>} : vector<32x384xbf16>, vector<384x128xbf16>, vector<32x128xf32> -> vector<32x128xf32>
    %c0_10 = arith.constant 0 : index
    %c0_11 = arith.constant 0 : index
    %37 = vector.load %arg3[%c0_10, %c0_11] : memref<1x128xf32, #tpu.memory_space<vmem>>, vector<1x128xf32>
    %38 = vector.broadcast %37 : vector<1x128xf32> to vector<32x128xf32>
    %39 = arith.addf %36, %38 : vector<32x128xf32>
    %cst_12 = arith.constant 0.000000e+00 : f32
    %40 = vector.broadcast %cst_12 : f32 to vector<32x128xf32>
    %41 = arith.maximumf %39, %40 : vector<32x128xf32>
    %c1_i32_13 = arith.constant 1 : i32
    %42 = tpu.dynamic_rotate %41 by %c1_i32_13 dim 0 : vector<32x128xf32>, i32 -> vector<32x128xf32>
    %cst_14 = arith.constant 0.000000e+00 : f32
    %43 = vector.shape_cast %20 : vector<32x1xi1> to vector<32x1xi1>
    %44 = vector.broadcast %43 : vector<32x1xi1> to vector<32x128xi1>
    %45 = vector.broadcast %cst_14 : f32 to vector<32x128xf32>
    %46 = arith.select %44, %42, %45 : vector<32x128xi1>, vector<32x128xf32>
    %c31_i32_15 = arith.constant 31 : i32
    %47 = tpu.dynamic_rotate %41 by %c31_i32_15 dim 0 : vector<32x128xf32>, i32 -> vector<32x128xf32>
    %cst_16 = arith.constant 0.000000e+00 : f32
    %48 = vector.shape_cast %22 : vector<32x1xi1> to vector<32x1xi1>
    %49 = vector.broadcast %48 : vector<32x1xi1> to vector<32x128xi1>
    %50 = vector.broadcast %cst_16 : f32 to vector<32x128xf32>
    %51 = arith.select %49, %47, %50 : vector<32x128xi1>, vector<32x128xf32>
    %52 = tpu.concatenate %46, %41, %51 in 1 : vector<32x128xf32>, vector<32x128xf32>, vector<32x128xf32> -> vector<32x384xf32>
    %53 = arith.truncf %52 : vector<32x384xf32> to vector<32x384xbf16>
    %c0_17 = arith.constant 0 : index
    %c0_18 = arith.constant 0 : index
    %54 = vector.load %arg4[%c0_17, %c0_18] : memref<384x128xbf16, #tpu.memory_space<vmem>>, vector<384x128xbf16>
    %cst_19 = arith.constant dense<0.000000e+00> : vector<32x128xf32>
    %55 = tpu.matmul %53, %54, %cst_19 {dimension_numbers = #tpu.dot_dimension_numbers<[1], [0], [0], [1], [0, 0, 1, 1], [], []>} : vector<32x384xbf16>, vector<384x128xbf16>, vector<32x128xf32> -> vector<32x128xf32>
    %c0_20 = arith.constant 0 : index
    %c0_21 = arith.constant 0 : index
    %56 = vector.load %arg5[%c0_20, %c0_21] : memref<1x128xf32, #tpu.memory_space<vmem>>, vector<1x128xf32>
    %57 = vector.broadcast %56 : vector<1x128xf32> to vector<32x128xf32>
    %58 = arith.addf %55, %57 : vector<32x128xf32>
    %59 = arith.addf %58, %1 : vector<32x128xf32>
    %cst_22 = arith.constant 0.000000e+00 : f32
    %60 = vector.broadcast %cst_22 : f32 to vector<32x128xf32>
    %61 = arith.maximumf %59, %60 : vector<32x128xf32>
    %c0_23 = arith.constant 0 : index
    %c0_24 = arith.constant 0 : index
    %62 = vector.load %arg6[%c0_23, %c0_24] : memref<32x128xf32, #tpu.memory_space<vmem>>, vector<32x128xf32>
    tpu.vector_store %arg6[%c0_23, %c0_24], %61 {strides = array<i32>} : memref<32x128xf32, #tpu.memory_space<vmem>>, vector<32x128xf32>,
    return
  }
  func.func @transform_0(%arg0: i32) -> (i32, i32) {
    %c0_i32 = arith.constant 0 : i32
    %c0_i32_0 = arith.constant 0 : i32
    return %arg0, %c0_i32 : i32, i32
  }
  func.func @transform_1(%arg0: i32) -> (i32, i32) {
    %c0_i32 = arith.constant 0 : i32
    %c0_i32_0 = arith.constant 0 : i32
    %c0_i32_1 = arith.constant 0 : i32
    return %c0_i32, %c0_i32_0 : i32, i32
  }
  func.func @transform_2(%arg0: i32) -> (i32, i32) {
    %c0_i32 = arith.constant 0 : i32
    %c0_i32_0 = arith.constant 0 : i32
    %c0_i32_1 = arith.constant 0 : i32
    return %c0_i32, %c0_i32_0 : i32, i32
  }
  func.func @transform_3(%arg0: i32) -> (i32, i32) {
    %c0_i32 = arith.constant 0 : i32
    %c0_i32_0 = arith.constant 0 : i32
    %c0_i32_1 = arith.constant 0 : i32
    return %c0_i32, %c0_i32_0 : i32, i32
  }
  func.func @transform_4(%arg0: i32) -> (i32, i32) {
    %c0_i32 = arith.constant 0 : i32
    %c0_i32_0 = arith.constant 0 : i32
    %c0_i32_1 = arith.constant 0 : i32
    return %c0_i32, %c0_i32_0 : i32, i32
  }
  func.func @transform_5(%arg0: i32) -> (i32, i32) {
    %c0_i32 = arith.constant 0 : i32
    %c0_i32_0 = arith.constant 0 : i32
    return %arg0, %c0_i32 : i32, i32
  }
}

</mosaic_0001>

<llo_original>
// kernel: tile.13
$region0: #{tile.13}
  #allocation0 [shape = 's32[1]{0}', space=sflag, size = 0x4, scoped, tag = 'scoped memory for tile.13']
  %s0 = inlined_call_operand.vmem [shape: f32[8], index: 0, kind: input, shape index: {}]
  %s1 = inlined_call_operand.vmem [shape: f32[16,8], index: 1, kind: output, shape index: {}]
  // Predicated region
  $region2: #{tile.13} parent=0 // pred_check
    _
  $region3: #{tile.13} parent=0 // pred_check_branch
    %3 = sbr.rel (0) target = $region5
  $region4: #{tile.13} parent=0 // pred_region
    _
  $region5: #{tile.13} parent=0 // pred_fallthru
    _
  %v4 = vld [vmem:[%s0] ss:$0 sm:$0xff]
  %5 = vst [vmem:[%s1] sm:$0xff] %v4
  %s6 = scalar_lea.vmem %s1, 8
  %7 = vst [vmem:[%s6] sm:$0xff] %v4

// kernel: tile.14
$region0: #{tile.14}
  %s0 = inlined_call_operand.vmem [shape: f32[16,8], index: 0, kind: input, shape index: {}]
  %s1 = inlined_call_operand.vmem [shape: f32[1,128], index: 1, kind: output, shape index: {}]
  $region1: #{tile.14} parent=0
    #allocation0 [shape = 'u8[4096]{0}', space=vmem, size = 0x1000, scoped, tag = 'scoped mem for output reshape']
    %v2 = vld [vmem:[%s0] sm:$0x1]
    %vm3 = vcmask 64512
    %4 = vst.msk [vmem:[#allocation0] sm:$0x1] %vm3, %v2
    %s5 = scalar_lea.vmem %s0, 15
    %v6 = vld [vmem:[%s5] sm:$0x1]
    %7 = vrot.lane.b32.xlu0 %v6, 120
    %v8 = vpop.permute.xlu0 %7
    %vm9 = vcmask 1048512
    %10 = vst.msk [vmem:[#allocation0] sm:$0x1] %vm9, %v8
    %s11 = scalar_lea.vmem %s0, 14
    %v12 = vld [vmem:[%s11] sm:$0x1]
    %13 = vrot.lane.b32.xlu0 %v12, 112
    %v14 = vpop.permute.xlu0 %13
    %vm15 = vcmask 982912
    %16 = vst.msk [vmem:[#allocation0] sm:$0x1] %vm15, %v14
    %s17 = scalar_lea.vmem %s0, 13
    %v18 = vld [vmem:[%s17] sm:$0x1]
    %19 = vrot.lane.b32.xlu0 %v18, 104
    %v20 = vpop.permute.xlu0 %19
    %vm21 = vcmask 917312
    %22 = vst.msk [vmem:[#allocation0] sm:$0x1] %vm21, %v20
    %s23 = scalar_lea.vmem %s0, 12
    %v24 = vld [vmem:[%s23] sm:$0x1]
    %25 = vrot.lane.b32.xlu0 %v24, 96
    %v26 = vpop.permute.xlu0 %25
    %vm27 = vcmask 851712
    %28 = vst.msk [vmem:[#allocation0] sm:$0x1] %vm27, %v26
    %s29 = scalar_lea.vmem %s0, 11
    %v30 = vld [vmem:[%s29] sm:$0x1]
    %31 = vrot.lane.b32.xlu0 %v30, 88
    %v32 = vpop.permute.xlu0 %31
    %vm33 = vcmask 786112
    %34 = vst.msk [vmem:[#allocation0] sm:$0x1] %vm33, %v32
    %s35 = scalar_lea.vmem %s0, 10
    %v36 = vld [vmem:[%s35] sm:$0x1]
    %37 = vrot.lane.b32.xlu0 %v36, 80
    %v38 = vpop.permute.xlu0 %37
    %vm39 = vcmask 720512
    %40 = vst.msk [vmem:[#allocation0] sm:$0x1] %vm39, %v38
    %s41 = scalar_lea.vmem %s0, 9
    %v42 = vld [vmem:[%s41] sm:$0x1]
    %43 = vrot.lane.b32.xlu0 %v42, 72
    %v44 = vpop.permute.xlu0 %43
    %vm45 = vcmask 654912
    %46 = vst.msk [vmem:[#allocation0] sm:$0x1] %vm45, %v44
    %s47 = scalar_lea.vmem %s0, 8
    %v48 = vld [vmem:[%s47] sm:$0x1]
    %49 = vrot.lane.b32.xlu0 %v48, 64
    %v50 = vpop.permute.xlu0 %49
    %vm51 = vcmask 589312
    %52 = vst.msk [vmem:[#allocation0] sm:$0x1] %vm51, %v50
    %s53 = scalar_lea.vmem %s0, 7
    %v54 = vld [vmem:[%s53] sm:$0x1]
    %55 = vrot.lane.b32.xlu0 %v54, 56
    %v56 = vpop.permute.xlu0 %55
    %vm57 = vcmask 523712
    %58 = vst.msk [vmem:[#allocation0] sm:$0x1] %vm57, %v56
    %s59 = scalar_lea.vmem %s0, 6
    %v60 = vld [vmem:[%s59] sm:$0x1]
    %61 = vrot.lane.b32.xlu0 %v60, 48
    %v62 = vpop.permute.xlu0 %61
    %vm63 = vcmask 458112
    %64 = vst.msk [vmem:[#allocation0] sm:$0x1] %vm63, %v62
    %s65 = scalar_lea.vmem %s0, 5
    %v66 = vld [vmem:[%s65] sm:$0x1]
    %67 = vrot.lane.b32.xlu0 %v66, 40
    %v68 = vpop.permute.xlu0 %67
    %vm69 = vcmask 392512
    %70 = vst.msk [vmem:[#allocation0] sm:$0x1] %vm69, %v68
    %s71 = scalar_lea.vmem %s0, 4
    %v72 = vld [vmem:[%s71] sm:$0x1]
    %73 = vrot.lane.b32.xlu0 %v72, 32
    %v74 = vpop.permute.xlu0 %73
    %vm75 = vcmask 326912
    %76 = vst.msk [vmem:[#allocation0] sm:$0x1] %vm75, %v74
    %s77 = scalar_lea.vmem %s0, 3
    %v78 = vld [vmem:[%s77] sm:$0x1]
    %79 = vrot.lane.b32.xlu0 %v78, 24
    %v80 = vpop.permute.xlu0 %79
    %vm81 = vcmask 261312
    %82 = vst.msk [vmem:[#allocation0] sm:$0x1] %vm81, %v80
    %s83 = scalar_lea.vmem %s0, 2
    %v84 = vld [vmem:[%s83] sm:$0x1]
    %85 = vrot.lane.b32.xlu0 %v84, 16
    %v86 = vpop.permute.xlu0 %85
    %vm87 = vcmask 195712
    %88 = vst.msk [vmem:[#allocation0] sm:$0x1] %vm87, %v86
    %s89 = scalar_lea.vmem %s0, 1
    %v90 = vld [vmem:[%s89] sm:$0x1]
    %91 = vrot.lane.b32.xlu0 %v90, 8
    %v92 = vpop.permute.xlu0 %91
    %vm93 = vcmask 130112
    %94 = vst.msk [vmem:[#allocation0] sm:$0x1] %vm93, %v92
    %s96 = sshll.u32 1, 1
    %s97 = ssub.s32 %s96, 1
    %v99 = vld [vmem:[#allocation0] sm:%s97]
    %s100 = sshll.u32 1, 1
    %s101 = ssub.s32 %s100, 1
    %102 = vst [vmem:[%s1] sm:%s101] %v99

// kernel: basic_block_forward.1
$region0: #{basic_block_forward.1}
  #allocation0 [shape = 'u32[]', space=smem, size = 0x4, offset = 0x4, fixed_abs, tag = 'smem constant byte address 0x4 - core index']
  #allocation1 [shape = 'u32[144,128]{1,0:T(1,128)}', space=vmem, size = 0x12000, scoped, tag = 'internal scratch']
  %s0 = inlined_call_operand.vmem [shape: bf16[32,128], index: 0, kind: input, shape index: {}]
  %s1 = inlined_call_operand.vmem [shape: bf16[384,128], index: 1, kind: input, shape index: {}]
  %s2 = inlined_call_operand.vmem [shape: f32[1,128], index: 2, kind: input, shape index: {}]
  %s3 = inlined_call_operand.vmem [shape: bf16[384,128], index: 3, kind: input, shape index: {}]
  %s4 = inlined_call_operand.vmem [shape: f32[1,128], index: 4, kind: input, shape index: {}]
  %s5 = inlined_call_operand.vmem [shape: f32[32,128], index: 5, kind: output, shape index: {}]
  %s6 = sld [smem:[#allocation0]]
  $region30: #{basic_block_forward.1} parent=0
    _
  %s8 = ssub.s32 1, %s6
  %s9 = scalar_select 0, %s8, %s6
  // Predicated region
  $region2: #{basic_block_forward.1} parent=0 // pred_check
    _
  $region3: #{basic_block_forward.1} parent=0 // pred_check_branch
    %11 = sbr.rel (0) target = $region5
  $region4: #{basic_block_forward.1} parent=0 // pred_region
    _
  $region5: #{basic_block_forward.1} parent=0 // pred_fallthru
    _
  // Predicated region
  $region6: #{basic_block_forward.1} parent=0 // pred_check
    _
  $region7: #{basic_block_forward.1} parent=0 // pred_check_branch
    %13 = sbr.rel (0) target = $region9
  $region8: #{basic_block_forward.1} parent=0 // pred_region
    _
  $region9: #{basic_block_forward.1} parent=0 // pred_fallthru
    _
  // Predicated region
  $region10: #{basic_block_forward.1} parent=0 // pred_check
    _
  $region11: #{basic_block_forward.1} parent=0 // pred_check_branch
    %15 = sbr.rel (0) target = $region13
  $region12: #{basic_block_forward.1} parent=0 // pred_region
    _
  $region13: #{basic_block_forward.1} parent=0 // pred_fallthru
    _
  // Predicated region
  $region14: #{basic_block_forward.1} parent=0 // pred_check
    _
  $region15: #{basic_block_forward.1} parent=0 // pred_check_branch
    %17 = sbr.rel (0) target = $region17
  $region16: #{basic_block_forward.1} parent=0 // pred_region
    _
  $region17: #{basic_block_forward.1} parent=0 // pred_fallthru
    _
  // Predicated region
  $region18: #{basic_block_forward.1} parent=0 // pred_check
    _
  $region19: #{basic_block_forward.1} parent=0 // pred_check_branch
    %19 = sbr.rel (0) target = $region21
  $region20: #{basic_block_forward.1} parent=0 // pred_region
    _
  $region21: #{basic_block_forward.1} parent=0 // pred_fallthru
    _
  %v21 = vld [vmem:[%s0] sm:$0xf]
  %v22 = vld [vmem:[%s0 + $0x4] sm:$0xf]
  %v23 = vld [vmem:[%s0 + $0x8] sm:$0xf]
  %v24 = vld [vmem:[%s0 + $0xc] sm:$0xf]
  %v25 = vunpack.c.l.bf16 %v21
  %v26 = vunpack.c.l.bf16 %v22
  %v27 = vunpack.c.l.bf16 %v23
  %v28 = vunpack.c.l.bf16 %v24
  %v29 = vlaneseq
  %v30 = vshrl.u32 %v29, 7
  %v31 = vadd.s32 %v30, 8
  %v32 = vadd.s32 %v30, 16
  %v33 = vadd.s32 %v30, 24
  %vm34 = vcmp.lt.s32.totalorder %v30, 0
  %v35 = vsub.s32 0, %v30
  %v36 = vsel %vm34, %v35, %v30
  %v37 = vshrl.u32 %v36, 4
  %v38 = vand.u32 %v36, 15
  %v39 = vsub.s32 0, %v38
  %v40 = vsel %vm34, %v39, %v38
  %vm41 = vcmp.lt.s32.totalorder %v31, 0
  %v42 = vsub.s32 0, %v31
  %v43 = vsel %vm41, %v42, %v31
  %v44 = vshrl.u32 %v43, 4
  %v45 = vand.u32 %v43, 15
  %v46 = vsub.s32 0, %v45
  %v47 = vsel %vm41, %v46, %v45
  %vm48 = vcmp.lt.s32.totalorder %v32, 0
  %v49 = vsub.s32 0, %v32
  %v50 = vsel %vm48, %v49, %v32
  %v51 = vshrl.u32 %v50, 4
  %v52 = vand.u32 %v50, 15
  %v53 = vsub.s32 0, %v52
  %v54 = vsel %vm48, %v53, %v52
  %vm55 = vcmp.lt.s32.totalorder %v33, 0
  %v56 = vsub.s32 0, %v33
  %v57 = vsel %vm55, %v56, %v33
  %v58 = vshrl.u32 %v57, 4
  %v59 = vand.u32 %v57, 15
  %v60 = vsub.s32 0, %v59
  %v61 = vsel %vm55, %v60, %v59
  %vm62 = vcmp.ne.s32.totalorder %v40, 0
  %vm63 = vcmp.ne.s32.totalorder %v47, 0
  %vm64 = vcmp.ne.s32.totalorder %v54, 0
  %vm65 = vcmp.ne.s32.totalorder %v61, 0
  %vm66 = vcmp.lt.s32.totalorder %v40, 0
  %vm67 = vcmp.lt.s32.totalorder %v47, 0
  %vm68 = vcmp.lt.s32.totalorder %v54, 0
  %vm69 = vcmp.lt.s32.totalorder %v61, 0
  %vm70 = vmand %vm66, %vm62
  %vm71 = vmand %vm67, %vm63
  %vm72 = vmand %vm68, %vm64
  %vm73 = vmand %vm69, %vm65
  %v74 = vadd.s32 %v40, 16
  %v75 = vadd.s32 %v47, 16
  %v76 = vadd.s32 %v54, 16
  %v77 = vadd.s32 %v61, 16
  %v78 = vsel %vm70, %v74, %v40
  %v79 = vsel %vm71, %v75, %v47
  %v80 = vsel %vm72, %v76, %v54
  %v81 = vsel %vm73, %v77, %v61
  %vm82 = vcmp.ne.s32.totalorder %v78, 0
  %vm83 = vcmp.ne.s32.totalorder %v79, 0
  %vm84 = vcmp.ne.s32.totalorder %v80, 0
  %vm85 = vcmp.ne.s32.totalorder %v81, 0
  %vm86 = vcmp.ne.s32.totalorder %v78, 15
  %vm87 = vcmp.ne.s32.totalorder %v79, 15
  %vm88 = vcmp.ne.s32.totalorder %v80, 15
  %vm89 = vcmp.ne.s32.totalorder %v81, 15
  %v90 = vrot.slane %v25, 7
  %v91 = vrot.slane %v26, 7
  %v92 = vrot.slane %v27, 7
  %v93 = vrot.slane %v28, 7
  %vm94 = vcmp.lt.s32.totalorder %v30, 1
  %v95 = vsel %vm94, %v92, %v93
  %v96 = vsel %vm94, %v91, %v92
  %v97 = vsel %vm94, %v90, %v91
  %v98 = vsel %vm94, %v93, %v90
  %v99 = vsel %vm82, 1, 0
  %v100 = vsel %vm83, 1, 0
  %v101 = vsel %vm84, 1, 0
  %v102 = vsel %vm85, 1, 0
  %vm103 = vcmp.eq.s32.totalorder %v99, 1
  %vm104 = vcmp.eq.s32.totalorder %v100, 1
  %vm105 = vcmp.eq.s32.totalorder %v101, 1
  %vm106 = vcmp.eq.s32.totalorder %v102, 1
  %v107 = vsel %vm103, %v98, 0.0
  %v108 = vsel %vm104, %v97, 0.0
  %v109 = vsel %vm105, %v96, 0.0
  %v110 = vsel %vm106, %v95, 0.0
  %v111 = vrot.slane %v25, 1
  %v112 = vrot.slane %v26, 1
  %v113 = vrot.slane %v27, 1
  %v114 = vrot.slane %v28, 1
  %vm115 = vcmp.lt.s32.totalorder %v30, 7
  %v116 = vsel %vm115, %v113, %v114
  %v117 = vsel %vm115, %v112, %v113
  %v118 = vsel %vm115, %v111, %v112
  %v119 = vsel %vm115, %v114, %v111
  %v120 = vsel %vm86, 1, 0
  %v121 = vsel %vm87, 1, 0
  %v122 = vsel %vm88, 1, 0
  %v123 = vsel %vm89, 1, 0
  %vm124 = vcmp.eq.s32.totalorder %v120, 1
  %vm125 = vcmp.eq.s32.totalorder %v121, 1
  %vm126 = vcmp.eq.s32.totalorder %v122, 1
  %vm127 = vcmp.eq.s32.totalorder %v123, 1
  %v128 = vsel %vm124, %v118, 0.0
  %v129 = vsel %vm125, %v117, 0.0
  %v130 = vsel %vm126, %v116, 0.0
  %v131 = vsel %vm127, %v119, 0.0
  %v132 = vpack.c.bf16 %v108, %v107
  %v133 = vpack.c.bf16 %v26, %v25
  %v134 = vpack.c.bf16 %v129, %v128
  %v135 = vpack.c.bf16 %v110, %v109
  %v136 = vpack.c.bf16 %v28, %v27
  %v137 = vpack.c.bf16 %v131, %v130
  %v138 = vld [vmem:[%s1] sm:$0xf]
  %v139 = vld [vmem:[%s1 + $0x4] sm:$0xf]
  %v140 = vld [vmem:[%s1 + $0x8] sm:$0xf]
  %v141 = vld [vmem:[%s1 + $0xc] sm:$0xf]
  %v142 = vld [vmem:[%s1 + $0x10] sm:$0xf]
  %v143 = vld [vmem:[%s1 + $0x14] sm:$0xf]
  %v144 = vld [vmem:[%s1 + $0x18] sm:$0xf]
  %v145 = vld [vmem:[%s1 + $0x1c] sm:$0xf]
  %v146 = vld [vmem:[%s1 + $0x20] sm:$0xf]
  %v147 = vld [vmem:[%s1 + $0x24] sm:$0xf]
  %v148 = vld [vmem:[%s1 + $0x28] sm:$0xf]
  %v149 = vld [vmem:[%s1 + $0x2c] sm:$0xf]
  %v150 = vld [vmem:[%s1 + $0x30] sm:$0xf]
  %v151 = vld [vmem:[%s1 + $0x34] sm:$0xf]
  %v152 = vld [vmem:[%s1 + $0x38] sm:$0xf]
  %v153 = vld [vmem:[%s1 + $0x3c] sm:$0xf]
  %v154 = vld [vmem:[%s1 + $0x40] sm:$0xf]
  %v155 = vld [vmem:[%s1 + $0x44] sm:$0xf]
  %v156 = vld [vmem:[%s1 + $0x48] sm:$0xf]
  %v157 = vld [vmem:[%s1 + $0x4c] sm:$0xf]
  %v158 = vld [vmem:[%s1 + $0x50] sm:$0xf]
  %v159 = vld [vmem:[%s1 + $0x54] sm:$0xf]
  %v160 = vld [vmem:[%s1 + $0x58] sm:$0xf]
  %v161 = vld [vmem:[%s1 + $0x5c] sm:$0xf]
  %v162 = vld [vmem:[%s1 + $0x60] sm:$0xf]
  %v163 = vld [vmem:[%s1 + $0x64] sm:$0xf]
  %v164 = vld [vmem:[%s1 + $0x68] sm:$0xf]
  %v165 = vld [vmem:[%s1 + $0x6c] sm:$0xf]
  %v166 = vld [vmem:[%s1 + $0x70] sm:$0xf]
  %v167 = vld [vmem:[%s1 + $0x74] sm:$0xf]
  %v168 = vld [vmem:[%s1 + $0x78] sm:$0xf]
  %v169 = vld [vmem:[%s1 + $0x7c] sm:$0xf]
  %v170 = vld [vmem:[%s1 + $0x80] sm:$0xf]
  %v171 = vld [vmem:[%s1 + $0x84] sm:$0xf]
  %v172 = vld [vmem:[%s1 + $0x88] sm:$0xf]
  %v173 = vld [vmem:[%s1 + $0x8c] sm:$0xf]
  %v174 = vld [vmem:[%s1 + $0x90] sm:$0xf]
  %v175 = vld [vmem:[%s1 + $0x94] sm:$0xf]
  %v176 = vld [vmem:[%s1 + $0x98] sm:$0xf]
  %v177 = vld [vmem:[%s1 + $0x9c] sm:$0xf]
  %v178 = vld [vmem:[%s1 + $0xa0] sm:$0xf]
  %v179 = vld [vmem:[%s1 + $0xa4] sm:$0xf]
  %v180 = vld [vmem:[%s1 + $0xa8] sm:$0xf]
  %v181 = vld [vmem:[%s1 + $0xac] sm:$0xf]
  %v182 = vld [vmem:[%s1 + $0xb0] sm:$0xf]
  %v183 = vld [vmem:[%s1 + $0xb4] sm:$0xf]
  %v184 = vld [vmem:[%s1 + $0xb8] sm:$0xf]
  %v185 = vld [vmem:[%s1 + $0xbc] sm:$0xf]
  %v186 = vld [vmem:[%s2] sm:$0x1]
  %v188 = vlaneseq
  %v189 = vshrl.u32 %v188, 7
  %v190 = vsub.s32 0, %v189
  %v191 = vrot.slane %v186, %v190
  %v241 = vunpack.c.l.b16 %v138
  %v242 = vunpack.c.l.b16 %v139
  %v243 = vunpack.c.l.b16 %v140
  %v244 = vunpack.c.l.b16 %v141
  %v245 = vunpack.c.l.b16 %v142
  %v246 = vunpack.c.l.b16 %v143
  %v247 = vunpack.c.l.b16 %v144
  %v248 = vunpack.c.l.b16 %v145
  %v249 = vunpack.c.l.b16 %v146
  %v250 = vunpack.c.l.b16 %v147
  %v251 = vunpack.c.l.b16 %v148
  %v252 = vunpack.c.l.b16 %v149
  %v253 = vunpack.c.l.b16 %v150
  %v254 = vunpack.c.l.b16 %v151
  %v255 = vunpack.c.l.b16 %v152
  %v256 = vunpack.c.l.b16 %v153
  %v257 = vunpack.c.l.b16 %v154
  %v258 = vunpack.c.l.b16 %v155
  %v259 = vunpack.c.l.b16 %v156
  %v260 = vunpack.c.l.b16 %v157
  %v261 = vunpack.c.l.b16 %v158
  %v262 = vunpack.c.l.b16 %v159
  %v263 = vunpack.c.l.b16 %v160
  %v264 = vunpack.c.l.b16 %v161
  %v265 = vunpack.c.l.b16 %v162
  %v266 = vunpack.c.l.b16 %v163
  %v267 = vunpack.c.l.b16 %v164
  %v268 = vunpack.c.l.b16 %v165
  %v269 = vunpack.c.l.b16 %v166
  %v270 = vunpack.c.l.b16 %v167
  %v271 = vunpack.c.l.b16 %v168
  %v272 = vunpack.c.l.b16 %v169
  %v273 = vunpack.c.l.b16 %v170
  %v274 = vunpack.c.l.b16 %v171
  %v275 = vunpack.c.l.b16 %v172
  %v276 = vunpack.c.l.b16 %v173
  %v277 = vunpack.c.l.b16 %v174
  %v278 = vunpack.c.l.b16 %v175
  %v279 = vunpack.c.l.b16 %v176
  %v280 = vunpack.c.l.b16 %v177
  %v281 = vunpack.c.l.b16 %v178
  %v282 = vunpack.c.l.b16 %v179
  %v283 = vunpack.c.l.b16 %v180
  %v284 = vunpack.c.l.b16 %v181
  %v285 = vunpack.c.l.b16 %v182
  %v286 = vunpack.c.l.b16 %v183
  %v287 = vunpack.c.l.b16 %v184
  %v288 = vunpack.c.l.b16 %v185
  %v289 = vpack.c.b16 %v242, %v241
  %v290 = vpack.c.b16 %v244, %v243
  %v291 = vpack.c.b16 %v246, %v245
  %v292 = vpack.c.b16 %v248, %v247
  %v293 = vpack.c.b16 %v250, %v249
  %v294 = vpack.c.b16 %v252, %v251
  %v295 = vpack.c.b16 %v254, %v253
  %v296 = vpack.c.b16 %v256, %v255
  %v297 = vpack.c.b16 %v258, %v257
  %v298 = vpack.c.b16 %v260, %v259
  %v299 = vpack.c.b16 %v262, %v261
  %v300 = vpack.c.b16 %v264, %v263
  %v301 = vpack.c.b16 %v266, %v265
  %v302 = vpack.c.b16 %v268, %v267
  %v303 = vpack.c.b16 %v270, %v269
  %v304 = vpack.c.b16 %v272, %v271
  %v305 = vpack.c.b16 %v274, %v273
  %v306 = vpack.c.b16 %v276, %v275
  %v307 = vpack.c.b16 %v278, %v277
  %v308 = vpack.c.b16 %v280, %v279
  %v309 = vpack.c.b16 %v282, %v281
  %v310 = vpack.c.b16 %v284, %v283
  %v311 = vpack.c.b16 %v286, %v285
  %v312 = vpack.c.b16 %v288, %v287
  %337 = vmatprep.subr.bf16.mxu0 0
  %338 = vmatpush1.bf16.msra.mxu0 %v296
  %339 = vmatprep.subr.bf16.mxu0 0
  %340 = vmatpush1.bf16.msra.mxu0 %v295
  %341 = vmatprep.subr.bf16.mxu0 0
  %342 = vmatpush1.bf16.msra.mxu0 %v294
  %343 = vmatprep.subr.bf16.mxu0 0
  %344 = vmatpush1.bf16.msra.mxu0 %v293
  %345 = vmatprep.subr.bf16.mxu0 0
  %346 = vmatpush1.bf16.msra.mxu0 %v292
  %347 = vmatprep.subr.bf16.mxu0 0
  %348 = vmatpush1.bf16.msra.mxu0 %v291
  %349 = vmatprep.subr.bf16.mxu0 0
  %350 = vmatpush1.bf16.msra.mxu0 %v290
  %351 = vmatprep.subr.bf16.mxu0 0
  %352 = vmatpush1.bf16.msra.mxu0 %v289
  %353 = vmatprep.subr.bf16.mxu0 0
  %354 = vmatpush2.bf16.msra.mxu0 %v304
  %355 = vmatprep.subr.bf16.mxu0 0
  %356 = vmatpush2.bf16.msra.mxu0 %v303
  %357 = vmatprep.subr.bf16.mxu0 0
  %358 = vmatpush2.bf16.msra.mxu0 %v302
  %359 = vmatprep.subr.bf16.mxu0 0
  %360 = vmatpush2.bf16.msra.mxu0 %v301
  %361 = vmatprep.subr.bf16.mxu0 0
  %362 = vmatpush2.bf16.msra.mxu0 %v300
  %363 = vmatprep.subr.bf16.mxu0 0
  %364 = vmatpush2.bf16.msra.mxu0 %v299
  %365 = vmatprep.subr.bf16.mxu0 0
  %366 = vmatpush2.bf16.msra.mxu0 %v298
  %367 = vmatprep.subr.bf16.mxu0 0
  %368 = vmatpush2.bf16.msra.mxu0 %v297
  %369 = vmatprep.mubr.bf16.mxu0 %v133
  %370 = vmatmul.mubr.bf16.gmra.mxu0 %v132
  %v371 = vpop.f32.mrf.mxu0
  %v372 = vadd.f32 %v191, %v371
  %v373 = vpop.f32.mrf.mxu0
  %v374 = vpop.f32.mrf.mxu0
  %v375 = vadd.f32 %v191, %v374
  %v376 = vpop.f32.mrf.mxu0
  %377 = vmatprep.mubr.bf16.mxu0 %v136
  %378 = vmatmul.mubr.bf16.gmra.mxu0 %v135
  %v379 = vpop.f32.mrf.mxu0
  %v380 = vadd.f32 %v191, %v379
  %v381 = vpop.f32.mrf.mxu0
  %v382 = vpop.f32.mrf.mxu0
  %v383 = vadd.f32 %v191, %v382
  %v384 = vpop.f32.mrf.mxu0
  %385 = vdwg.mxu0
  %386 = vmatprep.subr.bf16.mxu0 0
  %387 = vmatpush1.bf16.msra.mxu0 %v312
  %388 = vmatprep.subr.bf16.mxu0 0
  %389 = vmatpush1.bf16.msra.mxu0 %v311
  %390 = vmatprep.subr.bf16.mxu0 0
  %391 = vmatpush1.bf16.msra.mxu0 %v310
  %392 = vmatprep.subr.bf16.mxu0 0
  %393 = vmatpush1.bf16.msra.mxu0 %v309
  %394 = vmatprep.subr.bf16.mxu0 0
  %395 = vmatpush1.bf16.msra.mxu0 %v308
  %396 = vmatprep.subr.bf16.mxu0 0
  %397 = vmatpush1.bf16.msra.mxu0 %v307
  %398 = vmatprep.subr.bf16.mxu0 0
  %399 = vmatpush1.bf16.msra.mxu0 %v306
  %400 = vmatprep.subr.bf16.mxu0 0
  %401 = vmatpush1.bf16.msra.mxu0 %v305
  %402 = vmatprep.subr.bf16.mxu0 0
  %403 = vmatpush2.bf16.msra.mxu0 0
  %404 = vmatprep.subr.bf16.mxu0 0
  %405 = vmatpush2.bf16.msra.mxu0 0
  %406 = vmatprep.subr.bf16.mxu0 0
  %407 = vmatpush2.bf16.msra.mxu0 0
  %408 = vmatprep.subr.bf16.mxu0 0
  %409 = vmatpush2.bf16.msra.mxu0 0
  %410 = vmatprep.subr.bf16.mxu0 0
  %411 = vmatpush2.bf16.msra.mxu0 0
  %412 = vmatprep.subr.bf16.mxu0 0
  %413 = vmatpush2.bf16.msra.mxu0 0
  %414 = vmatprep.subr.bf16.mxu0 0
  %415 = vmatpush2.bf16.msra.mxu0 0
  %416 = vmatprep.subr.bf16.mxu0 0
  %417 = vmatpush2.bf16.msra.mxu0 0
  %418 = vmatprep.mubr.bf16.mxu0 0
  %419 = vmatmul.mubr.bf16.gmra.mxu0 %v134
  %v420 = vpop.f32.mrf.mxu0
  %v421 = vadd.f32 %v372, %v420
  %v422 = vpop.f32.mrf.mxu0
  %v423 = vpop.f32.mrf.mxu0
  %v424 = vadd.f32 %v375, %v423
  %v425 = vpop.f32.mrf.mxu0
  %426 = vmatprep.mubr.bf16.mxu0 0
  %427 = vmatmul.mubr.bf16.gmra.mxu0 %v137
  %v428 = vpop.f32.mrf.mxu0
  %v429 = vadd.f32 %v380, %v428
  %v430 = vpop.f32.mrf.mxu0
  %v431 = vpop.f32.mrf.mxu0
  %v432 = vadd.f32 %v383, %v431
  %v433 = vpop.f32.mrf.mxu0
  %434 = vdwg.mxu0
  %v435 = vmax.f32 %v421, 0.0
  %v436 = vmax.f32 %v424, 0.0
  %v437 = vmax.f32 %v429, 0.0
  %v438 = vmax.f32 %v432, 0.0
  %v439 = vrot.slane %v435, 7
  %v440 = vrot.slane %v436, 7
  %v441 = vrot.slane %v437, 7
  %v442 = vrot.slane %v438, 7
  %v443 = vsel %vm94, %v441, %v442
  %v444 = vsel %vm94, %v440, %v441
  %v445 = vsel %vm94, %v439, %v440
  %v446 = vsel %vm94, %v442, %v439
  %v447 = vsel %vm103, %v446, 0.0
  %v448 = vsel %vm104, %v445, 0.0
  %v449 = vsel %vm105, %v444, 0.0
  %v450 = vsel %vm106, %v443, 0.0
  %v451 = vrot.slane %v435, 1
  %v452 = vrot.slane %v436, 1
  %v453 = vrot.slane %v437, 1
  %v454 = vrot.slane %v438, 1
  %v455 = vsel %vm115, %v453, %v454
  %v456 = vsel %vm115, %v452, %v453
  %v457 = vsel %vm115, %v451, %v452
  %v458 = vsel %vm115, %v454, %v451
  %v459 = vsel %vm124, %v457, 0.0
  %v460 = vsel %vm125, %v456, 0.0
  %v461 = vsel %vm126, %v455, 0.0
  %v462 = vsel %vm127, %v458, 0.0
  %v463 = vpack.c.bf16 %v448, %v447
  %v464 = vpack.c.bf16 %v436, %v435
  %v465 = vpack.c.bf16 %v460, %v459
  %v466 = vpack.c.bf16 %v450, %v449
  %v467 = vpack.c.bf16 %v438, %v437
  %v468 = vpack.c.bf16 %v462, %v461
  %v469 = vld [vmem:[%s3] sm:$0xf]
  %v470 = vld [vmem:[%s3 + $0x4] sm:$0xf]
  %v471 = vld [vmem:[%s3 + $0x8] sm:$0xf]
  %v472 = vld [vmem:[%s3 + $0xc] sm:$0xf]
  %v473 = vld [vmem:[%s3 + $0x10] sm:$0xf]
  %v474 = vld [vmem:[%s3 + $0x14] sm:$0xf]
  %v475 = vld [vmem:[%s3 + $0x18] sm:$0xf]
  %v476 = vld [vmem:[%s3 + $0x1c] sm:$0xf]
  %v477 = vld [vmem:[%s3 + $0x20] sm:$0xf]
  %v478 = vld [vmem:[%s3 + $0x24] sm:$0xf]
  %v479 = vld [vmem:[%s3 + $0x28] sm:$0xf]
  %v480 = vld [vmem:[%s3 + $0x2c] sm:$0xf]
  %v481 = vld [vmem:[%s3 + $0x30] sm:$0xf]
  %v482 = vld [vmem:[%s3 + $0x34] sm:$0xf]
  %v483 = vld [vmem:[%s3 + $0x38] sm:$0xf]
  %v484 = vld [vmem:[%s3 + $0x3c] sm:$0xf]
  %v485 = vld [vmem:[%s3 + $0x40] sm:$0xf]
  %v486 = vld [vmem:[%s3 + $0x44] sm:$0xf]
  %v487 = vld [vmem:[%s3 + $0x48] sm:$0xf]
  %v488 = vld [vmem:[%s3 + $0x4c] sm:$0xf]
  %v489 = vld [vmem:[%s3 + $0x50] sm:$0xf]
  %v490 = vld [vmem:[%s3 + $0x54] sm:$0xf]
  %v491 = vld [vmem:[%s3 + $0x58] sm:$0xf]
  %v492 = vld [vmem:[%s3 + $0x5c] sm:$0xf]
  %v493 = vld [vmem:[%s3 + $0x60] sm:$0xf]
  %v494 = vld [vmem:[%s3 + $0x64] sm:$0xf]
  %v495 = vld [vmem:[%s3 + $0x68] sm:$0xf]
  %v496 = vld [vmem:[%s3 + $0x6c] sm:$0xf]
  %v497 = vld [vmem:[%s3 + $0x70] sm:$0xf]
  %v498 = vld [vmem:[%s3 + $0x74] sm:$0xf]
  %v499 = vld [vmem:[%s3 + $0x78] sm:$0xf]
  %v500 = vld [vmem:[%s3 + $0x7c] sm:$0xf]
  %v501 = vld [vmem:[%s3 + $0x80] sm:$0xf]
  %v502 = vld [vmem:[%s3 + $0x84] sm:$0xf]
  %v503 = vld [vmem:[%s3 + $0x88] sm:$0xf]
  %v504 = vld [vmem:[%s3 + $0x8c] sm:$0xf]
  %v505 = vld [vmem:[%s3 + $0x90] sm:$0xf]
  %v506 = vld [vmem:[%s3 + $0x94] sm:$0xf]
  %v507 = vld [vmem:[%s3 + $0x98] sm:$0xf]
  %v508 = vld [vmem:[%s3 + $0x9c] sm:$0xf]
  %v509 = vld [vmem:[%s3 + $0xa0] sm:$0xf]
  %v510 = vld [vmem:[%s3 + $0xa4] sm:$0xf]
  %v511 = vld [vmem:[%s3 + $0xa8] sm:$0xf]
  %v512 = vld [vmem:[%s3 + $0xac] sm:$0xf]
  %v513 = vld [vmem:[%s3 + $0xb0] sm:$0xf]
  %v514 = vld [vmem:[%s3 + $0xb4] sm:$0xf]
  %v515 = vld [vmem:[%s3 + $0xb8] sm:$0xf]
  %v516 = vld [vmem:[%s3 + $0xbc] sm:$0xf]
  %v517 = vld [vmem:[%s4] sm:$0x1]
  %v519 = vlaneseq
  %v520 = vshrl.u32 %v519, 7
  %v521 = vsub.s32 0, %v520
  %v522 = vrot.slane %v517, %v521
  %v572 = vunpack.c.l.b16 %v469
  %v573 = vunpack.c.l.b16 %v470
  %v574 = vunpack.c.l.b16 %v471
  %v575 = vunpack.c.l.b16 %v472
  %v576 = vunpack.c.l.b16 %v473
  %v577 = vunpack.c.l.b16 %v474
  %v578 = vunpack.c.l.b16 %v475
  %v579 = vunpack.c.l.b16 %v476
  %v580 = vunpack.c.l.b16 %v477
  %v581 = vunpack.c.l.b16 %v478
  %v582 = vunpack.c.l.b16 %v479
  %v583 = vunpack.c.l.b16 %v480
  %v584 = vunpack.c.l.b16 %v481
  %v585 = vunpack.c.l.b16 %v482
  %v586 = vunpack.c.l.b16 %v483
  %v587 = vunpack.c.l.b16 %v484
  %v588 = vunpack.c.l.b16 %v485
  %v589 = vunpack.c.l.b16 %v486
  %v590 = vunpack.c.l.b16 %v487
  %v591 = vunpack.c.l.b16 %v488
  %v592 = vunpack.c.l.b16 %v489
  %v593 = vunpack.c.l.b16 %v490
  %v594 = vunpack.c.l.b16 %v491
  %v595 = vunpack.c.l.b16 %v492
  %v596 = vunpack.c.l.b16 %v493
  %v597 = vunpack.c.l.b16 %v494
  %v598 = vunpack.c.l.b16 %v495
  %v599 = vunpack.c.l.b16 %v496
  %v600 = vunpack.c.l.b16 %v497
  %v601 = vunpack.c.l.b16 %v498
  %v602 = vunpack.c.l.b16 %v499
  %v603 = vunpack.c.l.b16 %v500
  %v604 = vunpack.c.l.b16 %v501
  %v605 = vunpack.c.l.b16 %v502
  %v606 = vunpack.c.l.b16 %v503
  %v607 = vunpack.c.l.b16 %v504
  %v608 = vunpack.c.l.b16 %v505
  %v609 = vunpack.c.l.b16 %v506
  %v610 = vunpack.c.l.b16 %v507
  %v611 = vunpack.c.l.b16 %v508
  %v612 = vunpack.c.l.b16 %v509
  %v613 = vunpack.c.l.b16 %v510
  %v614 = vunpack.c.l.b16 %v511
  %v615 = vunpack.c.l.b16 %v512
  %v616 = vunpack.c.l.b16 %v513
  %v617 = vunpack.c.l.b16 %v514
  %v618 = vunpack.c.l.b16 %v515
  %v619 = vunpack.c.l.b16 %v516
  %v620 = vpack.c.b16 %v573, %v572
  %v621 = vpack.c.b16 %v575, %v574
  %v622 = vpack.c.b16 %v577, %v576
  %v623 = vpack.c.b16 %v579, %v578
  %v624 = vpack.c.b16 %v581, %v580
  %v625 = vpack.c.b16 %v583, %v582
  %v626 = vpack.c.b16 %v585, %v584
  %v627 = vpack.c.b16 %v587, %v586
  %v628 = vpack.c.b16 %v589, %v588
  %v629 = vpack.c.b16 %v591, %v590
  %v630 = vpack.c.b16 %v593, %v592
  %v631 = vpack.c.b16 %v595, %v594
  %v632 = vpack.c.b16 %v597, %v596
  %v633 = vpack.c.b16 %v599, %v598
  %v634 = vpack.c.b16 %v601, %v600
  %v635 = vpack.c.b16 %v603, %v602
  %v636 = vpack.c.b16 %v605, %v604
  %v637 = vpack.c.b16 %v607, %v606
  %v638 = vpack.c.b16 %v609, %v608
  %v639 = vpack.c.b16 %v611, %v610
  %v640 = vpack.c.b16 %v613, %v612
  %v641 = vpack.c.b16 %v615, %v614
  %v642 = vpack.c.b16 %v617, %v616
  %v643 = vpack.c.b16 %v619, %v618
  %668 = vmatprep.subr.bf16.mxu0 0
  %669 = vmatpush1.bf16.msra.mxu0 %v627
  %670 = vmatprep.subr.bf16.mxu0 0
  %671 = vmatpush1.bf16.msra.mxu0 %v626
  %672 = vmatprep.subr.bf16.mxu0 0
  %673 = vmatpush1.bf16.msra.mxu0 %v625
  %674 = vmatprep.subr.bf16.mxu0 0
  %675 = vmatpush1.bf16.msra.mxu0 %v624
  %676 = vmatprep.subr.bf16.mxu0 0
  %677 = vmatpush1.bf16.msra.mxu0 %v623
  %678 = vmatprep.subr.bf16.mxu0 0
  %679 = vmatpush1.bf16.msra.mxu0 %v622
  %680 = vmatprep.subr.bf16.mxu0 0
  %681 = vmatpush1.bf16.msra.mxu0 %v621
  %682 = vmatprep.subr.bf16.mxu0 0
  %683 = vmatpush1.bf16.msra.mxu0 %v620
  %684 = vmatprep.subr.bf16.mxu0 0
  %685 = vmatpush2.bf16.msra.mxu0 %v635
  %686 = vmatprep.subr.bf16.mxu0 0
  %687 = vmatpush2.bf16.msra.mxu0 %v634
  %688 = vmatprep.subr.bf16.mxu0 0
  %689 = vmatpush2.bf16.msra.mxu0 %v633
  %690 = vmatprep.subr.bf16.mxu0 0
  %691 = vmatpush2.bf16.msra.mxu0 %v632
  %692 = vmatprep.subr.bf16.mxu0 0
  %693 = vmatpush2.bf16.msra.mxu0 %v631
  %694 = vmatprep.subr.bf16.mxu0 0
  %695 = vmatpush2.bf16.msra.mxu0 %v630
  %696 = vmatprep.subr.bf16.mxu0 0
  %697 = vmatpush2.bf16.msra.mxu0 %v629
  %698 = vmatprep.subr.bf16.mxu0 0
  %699 = vmatpush2.bf16.msra.mxu0 %v628
  %700 = vmatprep.mubr.bf16.mxu0 %v464
  %701 = vmatmul.mubr.bf16.gmra.mxu0 %v463
  %v702 = vpop.f32.mrf.mxu0
  %v703 = vadd.f32 %v522, %v702
  %v704 = vpop.f32.mrf.mxu0
  %v705 = vpop.f32.mrf.mxu0
  %v706 = vadd.f32 %v522, %v705
  %v707 = vpop.f32.mrf.mxu0
  %708 = vmatprep.mubr.bf16.mxu0 %v467
  %709 = vmatmul.mubr.bf16.gmra.mxu0 %v466
  %v710 = vpop.f32.mrf.mxu0
  %v711 = vadd.f32 %v522, %v710
  %v712 = vpop.f32.mrf.mxu0
  %v713 = vpop.f32.mrf.mxu0
  %v714 = vadd.f32 %v522, %v713
  %v715 = vpop.f32.mrf.mxu0
  %716 = vdwg.mxu0
  %717 = vmatprep.subr.bf16.mxu0 0
  %718 = vmatpush1.bf16.msra.mxu0 %v643
  %719 = vmatprep.subr.bf16.mxu0 0
  %720 = vmatpush1.bf16.msra.mxu0 %v642
  %721 = vmatprep.subr.bf16.mxu0 0
  %722 = vmatpush1.bf16.msra.mxu0 %v641
  %723 = vmatprep.subr.bf16.mxu0 0
  %724 = vmatpush1.bf16.msra.mxu0 %v640
  %725 = vmatprep.subr.bf16.mxu0 0
  %726 = vmatpush1.bf16.msra.mxu0 %v639
  %727 = vmatprep.subr.bf16.mxu0 0
  %728 = vmatpush1.bf16.msra.mxu0 %v638
  %729 = vmatprep.subr.bf16.mxu0 0
  %730 = vmatpush1.bf16.msra.mxu0 %v637
  %731 = vmatprep.subr.bf16.mxu0 0
  %732 = vmatpush1.bf16.msra.mxu0 %v636
  %733 = vmatprep.subr.bf16.mxu0 0
  %734 = vmatpush2.bf16.msra.mxu0 0
  %735 = vmatprep.subr.bf16.mxu0 0
  %736 = vmatpush2.bf16.msra.mxu0 0
  %737 = vmatprep.subr.bf16.mxu0 0
  %738 = vmatpush2.bf16.msra.mxu0 0
  %739 = vmatprep.subr.bf16.mxu0 0
  %740 = vmatpush2.bf16.msra.mxu0 0
  %741 = vmatprep.subr.bf16.mxu0 0
  %742 = vmatpush2.bf16.msra.mxu0 0
  %743 = vmatprep.subr.bf16.mxu0 0
  %744 = vmatpush2.bf16.msra.mxu0 0
  %745 = vmatprep.subr.bf16.mxu0 0
  %746 = vmatpush2.bf16.msra.mxu0 0
  %747 = vmatprep.subr.bf16.mxu0 0
  %748 = vmatpush2.bf16.msra.mxu0 0
  %749 = vmatprep.mubr.bf16.mxu0 0
  %750 = vmatmul.mubr.bf16.gmra.mxu0 %v465
  %v751 = vpop.f32.mrf.mxu0
  %v752 = vadd.f32 %v703, %v751
  %v753 = vpop.f32.mrf.mxu0
  %v754 = vpop.f32.mrf.mxu0
  %v755 = vadd.f32 %v706, %v754
  %v756 = vpop.f32.mrf.mxu0
  %757 = vmatprep.mubr.bf16.mxu0 0
  %758 = vmatmul.mubr.bf16.gmra.mxu0 %v468
  %v759 = vpop.f32.mrf.mxu0
  %v760 = vadd.f32 %v711, %v759
  %v761 = vpop.f32.mrf.mxu0
  %v762 = vpop.f32.mrf.mxu0
  %v763 = vadd.f32 %v714, %v762
  %v764 = vpop.f32.mrf.mxu0
  %765 = vdwg.mxu0
  %v766 = vadd.f32 %v752, %v25
  %v767 = vadd.f32 %v755, %v26
  %v768 = vadd.f32 %v760, %v27
  %v769 = vadd.f32 %v763, %v28
  %v770 = vmax.f32 %v766, 0.0
  %v771 = vmax.f32 %v767, 0.0
  %v772 = vmax.f32 %v768, 0.0
  %v773 = vmax.f32 %v769, 0.0
  %774 = vst [vmem:[%s5] sm:$0xff] %v770
  %775 = vst [vmem:[%s5 + $0x8] sm:$0xff] %v771
  %776 = vst [vmem:[%s5 + $0x10] sm:$0xff] %v772
  %777 = vst [vmem:[%s5 + $0x18] sm:$0xff] %v773
  // Predicated region
  $region22: #{basic_block_forward.1} parent=0 // pred_check
    _
  $region23: #{basic_block_forward.1} parent=0 // pred_check_branch
    %779 = sbr.rel (0) target = $region25
  $region24: #{basic_block_forward.1} parent=0 // pred_region
    _
  $region25: #{basic_block_forward.1} parent=0 // pred_fallthru
    _
  // Predicated region
  $region26: #{basic_block_forward.1} parent=0 // pred_check
    _
  $region27: #{basic_block_forward.1} parent=0 // pred_check_branch
    %781 = sbr.rel (0) target = $region29
  $region28: #{basic_block_forward.1} parent=0 // pred_region
    _
  $region29: #{basic_block_forward.1} parent=0 // pred_fallthru
    _

</llo_original>
